<compile_context>
chip_gen: v6e
topology: v6e:2x2x1
jax: 0.10.0
libtpu: 0.0.40
codegen_flags: <defaults>
</compile_context>

<pallas_src>
import jax
import jax.numpy as jnp
from jax.experimental import pallas as pl
from jax.experimental.pallas import tpu as pltpu

WINDOW_SIZE = 7
PAD = WINDOW_SIZE // 2          # matches F.conv2d(..., padding=3)
DATA_RANGE = 1.0
C1 = 0.01 ** 2 * DATA_RANGE ** 2
C2 = 0.03 ** 2 * DATA_RANGE ** 2


def _ssim_kernel(x1_ref, x2_ref, aw_ref, av_ref, out_ref):
    """One grid step: a batch tile of images flattened to (B_TILE*H, W).

    box(X) = A_v @ (X @ A_w)  ==  conv2d(X, ones(7,7), padding=3) (zero pad),
    where A_w is the (W, W) banded all-ones matrix and A_v is the
    block-diagonal (B*H, B*H) banded matrix (block-diag keeps windows from
    crossing image boundaries).  Both passes run on the MXU.
    """
    x1 = x1_ref[...]
    x2 = x2_ref[...]
    aw = aw_ref[...]
    av = av_ref[...]

    def box(y):
        t = jnp.dot(y, aw, preferred_element_type=jnp.float32)
        return jnp.dot(av, t, preferred_element_type=jnp.float32)

    # One statistic at a time: each elementwise product is consumed
    # immediately by its box filter, keeping the live set small.
    mu1 = box(x1)
    mu2 = box(x2)
    s11 = box(x1 * x1)
    s22 = box(x2 * x2)
    s12 = box(x1 * x2)

    mu1_sq = mu1 * mu1
    mu2_sq = mu2 * mu2
    mu12 = mu1 * mu2
    sigma1_sq = s11 - mu1_sq
    sigma2_sq = s22 - mu2_sq
    sigma12 = s12 - mu12

    num = (2.0 * mu12 + C1) * (2.0 * sigma12 + C2)
    den = (mu1_sq + mu2_sq + C1) * (sigma1_sq + sigma2_sq + C2)
    # EUP reciprocal; approx=False keeps numerics essentially exact
    # (switch to approx=True if the loss tolerance allows a tiny perturbation).
    ssim_map = num * pl.reciprocal(den, approx=False)

    partial = jnp.sum(ssim_map)
    # Lane-aligned (1, 8, 128) partial-sum tile, one per grid step.
    out_ref[...] = jnp.zeros(out_ref.shape, jnp.float32) + partial


def _pick_batch_tile(n, h, w, max_block_bytes=1 << 20, max_rows=2048):
    """Largest divisor of n whose flattened (b*h, w) f32 block fits the budget,
    keeps the sublane dim 8-aligned (or spans the whole array), and keeps the
    block-diagonal vertical matrix (b*h, b*h) small."""
    candidates = []
    for b in range(1, n + 1):
        if n % b:
            continue
        aligned = ((b * h) % 8 == 0) or (b == n)
        fits = (b * h * w * 4 <= max_block_bytes) and (b * h <= max_rows)
        if aligned and fits:
            candidates.append(b)
    if not candidates:
        return 1 if h % 8 == 0 else n
    return max(candidates)


def ssim_loss(img1, img2):
    """img1, img2: (N, 1, H, W) arrays (PyTorch NCHW; conv weight is (1,1,7,7))."""
    n, c, h, w = img1.shape
    assert c == 1, "SSIMLoss conv weight is (1,1,7,7): channel dim must be 1"

    x1 = img1.astype(jnp.float32).reshape(n * h, w)   # free, contiguous reshape
    x2 = img2.astype(jnp.float32).reshape(n * h, w)
    if DATA_RANGE != 1.0:                             # skipped: data_range == 1
        inv = jnp.float32(1.0 / DATA_RANGE)
        x1 = x1 * inv
        x2 = x2 * inv

    b_tile = _pick_batch_tile(n, h, w)
    g = n // b_tile
    bh = b_tile * h

    # Constant banded 0/1 matrices (tiny; built once in glue).
    r = jnp.arange(bh)
    av = ((jnp.abs(r[:, None] - r[None, :]) <= PAD)
          & ((r[:, None] // h) == (r[None, :] // h))).astype(jnp.float32)
    cidx = jnp.arange(w)
    aw = (jnp.abs(cidx[:, None] - cidx[None, :]) <= PAD).astype(jnp.float32)

    flops = g * (5 * 2 * (bh * w * w + bh * bh * w) + 21 * bh * w)
    bytes_accessed = 2 * n * h * w * 4 + (w * w + bh * bh) * 4 + g * 8 * 128 * 4

    partials = pl.pallas_call(
        _ssim_kernel,
        out_shape=jax.ShapeDtypeStruct((g, 8, 128), jnp.float32),
        grid_spec=pltpu.PrefetchScalarGridSpec(
            num_scalar_prefetch=0,
            grid=(g,),
            in_specs=[
                pl.BlockSpec((bh, w), lambda b: (b, 0)),
                pl.BlockSpec((bh, w), lambda b: (b, 0)),
                pl.BlockSpec((w, w), lambda b: (0, 0)),
                pl.BlockSpec((bh, bh), lambda b: (0, 0)),
            ],
            out_specs=pl.BlockSpec((1, 8, 128), lambda b: (b, 0, 0)),
        ),
        compiler_params=pltpu.CompilerParams(
            dimension_semantics=("parallel",)),
        cost_estimate=pl.CostEstimate(
            flops=flops, transcendentals=g * bh * w,
            bytes_accessed=bytes_accessed),
    )(x1, x2, aw, av)

    numel = n * c * h * w                 # conv output is H x W (pad=3, k=7)
    total = jnp.sum(partials[:, 0, 0])
    return jnp.float32(1.0) - total / jnp.float32(numel)


def _ssim_loss_reference(img1, img2):
    """Pure-JAX reference mirroring the PyTorch module (for a sanity check)."""
    x1 = img1.astype(jnp.float32) / DATA_RANGE
    x2 = img2.astype(jnp.float32) / DATA_RANGE
    ones_k = jnp.ones((1, 1, WINDOW_SIZE, WINDOW_SIZE), jnp.float32)

    def conv(x):
        return jax.lax.conv_general_dilated(
            x, ones_k, (1, 1), [(PAD, PAD), (PAD, PAD)],
            dimension_numbers=("NCHW", "OIHW", "NCHW"),
            precision=jax.lax.Precision.HIGHEST)

    mu1, mu2 = conv(x1), conv(x2)
    s11 = conv(x1 * x1) - mu1 * mu1
    s22 = conv(x2 * x2) - mu2 * mu2
    s12 = conv(x1 * x2) - mu1 * mu2
    num = (2.0 * mu1 * mu2 + C1) * (2.0 * s12 + C2)
    den = (mu1 * mu1 + mu2 * mu2 + C1) * (s11 + s22 + C2)
    return 1.0 - jnp.mean(num / den)


if __name__ == "__main__":
    key = jax.random.PRNGKey(0)
    k1, k2 = jax.random.split(key)
    # NCHW with C == 1 (required by the (1,1,7,7) conv weight, no groups).
    img1 = jax.random.uniform(k1, (2, 1, 16, 16), dtype=jnp.float32)
    img2 = jax.random.uniform(k2, (2, 1, 16, 16), dtype=jnp.float32)

    loss_fn = jax.jit(ssim_loss)
    loss = jax.block_until_ready(loss_fn(img1, img2))
    assert loss.shape == () and bool(jnp.isfinite(loss))

    ref = jax.block_until_ready(_ssim_loss_reference(img1, img2))
    assert abs(float(loss) - float(ref)) < 2e-2, (float(loss), float(ref))

    print("KERNEL_OK")
</pallas_src>

<mosaic_0001>
module attributes {stable_mosaic.version = 11 : i64} {
  func.func @_ssim_kernel(%arg0: i32, %arg1: memref<32x16xf32, #tpu.memory_space<vmem>>, %arg2: memref<32x16xf32, #tpu.memory_space<vmem>>, %arg3: memref<16x16xf32, #tpu.memory_space<vmem>>, %arg4: memref<32x32xf32, #tpu.memory_space<vmem>>, %arg5: memref<1x8x128xf32, #tpu.memory_space<vmem>>) attributes {dimension_semantics = [#tpu.dimension_semantics<parallel>], iteration_bounds = array<i64: 1>, scalar_prefetch = 0 : i64, scratch_operands = 0 : i64, tpu.core_type = #tpu.core_type<tc>, window_params = [{transform_indices = @transform_0, window_bounds = array<i64: 32, 16>}, {transform_indices = @transform_1, window_bounds = array<i64: 32, 16>}, {pipeline_mode = #tpu.pipeline_mode<synchronous>, transform_indices = @transform_2, window_bounds = array<i64: 16, 16>}, {pipeline_mode = #tpu.pipeline_mode<synchronous>, transform_indices = @transform_3, window_bounds = array<i64: 32, 32>}, {transform_indices = @transform_4, window_bounds = array<i64: 1, 8, 128>}]} {
    %c0 = arith.constant 0 : index
    %c0_0 = arith.constant 0 : index
    %0 = vector.load %arg1[%c0, %c0_0] : memref<32x16xf32, #tpu.memory_space<vmem>>, vector<32x16xf32>
    %c0_1 = arith.constant 0 : index
    %c0_2 = arith.constant 0 : index
    %1 = vector.load %arg2[%c0_1, %c0_2] : memref<32x16xf32, #tpu.memory_space<vmem>>, vector<32x16xf32>
    %c0_3 = arith.constant 0 : index
    %c0_4 = arith.constant 0 : index
    %2 = vector.load %arg3[%c0_3, %c0_4] : memref<16x16xf32, #tpu.memory_space<vmem>>, vector<16x16xf32>
    %c0_5 = arith.constant 0 : index
    %c0_6 = arith.constant 0 : index
    %3 = vector.load %arg4[%c0_5, %c0_6] : memref<32x32xf32, #tpu.memory_space<vmem>>, vector<32x32xf32>
    %cst = arith.constant dense<0.000000e+00> : vector<32x16xf32>
    %4 = tpu.matmul %0, %2, %cst {dimension_numbers = #tpu.dot_dimension_numbers<[1], [0], [0], [1], [0, 0, 1, 1], [], []>} : vector<32x16xf32>, vector<16x16xf32>, vector<32x16xf32> -> vector<32x16xf32>
    %cst_7 = arith.constant dense<0.000000e+00> : vector<32x16xf32>
    %5 = tpu.matmul %3, %4, %cst_7 {dimension_numbers = #tpu.dot_dimension_numbers<[1], [0], [0], [1], [0, 0, 1, 1], [], []>} : vector<32x32xf32>, vector<32x16xf32>, vector<32x16xf32> -> vector<32x16xf32>
    %cst_8 = arith.constant dense<0.000000e+00> : vector<32x16xf32>
    %6 = tpu.matmul %1, %2, %cst_8 {dimension_numbers = #tpu.dot_dimension_numbers<[1], [0], [0], [1], [0, 0, 1, 1], [], []>} : vector<32x16xf32>, vector<16x16xf32>, vector<32x16xf32> -> vector<32x16xf32>
    %cst_9 = arith.constant dense<0.000000e+00> : vector<32x16xf32>
    %7 = tpu.matmul %3, %6, %cst_9 {dimension_numbers = #tpu.dot_dimension_numbers<[1], [0], [0], [1], [0, 0, 1, 1], [], []>} : vector<32x32xf32>, vector<32x16xf32>, vector<32x16xf32> -> vector<32x16xf32>
    %8 = arith.mulf %0, %0 : vector<32x16xf32>
    %cst_10 = arith.constant dense<0.000000e+00> : vector<32x16xf32>
    %9 = tpu.matmul %8, %2, %cst_10 {dimension_numbers = #tpu.dot_dimension_numbers<[1], [0], [0], [1], [0, 0, 1, 1], [], []>} : vector<32x16xf32>, vector<16x16xf32>, vector<32x16xf32> -> vector<32x16xf32>
    %cst_11 = arith.constant dense<0.000000e+00> : vector<32x16xf32>
    %10 = tpu.matmul %3, %9, %cst_11 {dimension_numbers = #tpu.dot_dimension_numbers<[1], [0], [0], [1], [0, 0, 1, 1], [], []>} : vector<32x32xf32>, vector<32x16xf32>, vector<32x16xf32> -> vector<32x16xf32>
    %11 = arith.mulf %1, %1 : vector<32x16xf32>
    %cst_12 = arith.constant dense<0.000000e+00> : vector<32x16xf32>
    %12 = tpu.matmul %11, %2, %cst_12 {dimension_numbers = #tpu.dot_dimension_numbers<[1], [0], [0], [1], [0, 0, 1, 1], [], []>} : vector<32x16xf32>, vector<16x16xf32>, vector<32x16xf32> -> vector<32x16xf32>
    %cst_13 = arith.constant dense<0.000000e+00> : vector<32x16xf32>
    %13 = tpu.matmul %3, %12, %cst_13 {dimension_numbers = #tpu.dot_dimension_numbers<[1], [0], [0], [1], [0, 0, 1, 1], [], []>} : vector<32x32xf32>, vector<32x16xf32>, vector<32x16xf32> -> vector<32x16xf32>
    %14 = arith.mulf %0, %1 : vector<32x16xf32>
    %cst_14 = arith.constant dense<0.000000e+00> : vector<32x16xf32>
    %15 = tpu.matmul %14, %2, %cst_14 {dimension_numbers = #tpu.dot_dimension_numbers<[1], [0], [0], [1], [0, 0, 1, 1], [], []>} : vector<32x16xf32>, vector<16x16xf32>, vector<32x16xf32> -> vector<32x16xf32>
    %cst_15 = arith.constant dense<0.000000e+00> : vector<32x16xf32>
    %16 = tpu.matmul %3, %15, %cst_15 {dimension_numbers = #tpu.dot_dimension_numbers<[1], [0], [0], [1], [0, 0, 1, 1], [], []>} : vector<32x32xf32>, vector<32x16xf32>, vector<32x16xf32> -> vector<32x16xf32>
    %17 = arith.mulf %5, %5 : vector<32x16xf32>
    %18 = arith.mulf %7, %7 : vector<32x16xf32>
    %19 = arith.mulf %5, %7 : vector<32x16xf32>
    %20 = arith.subf %10, %17 : vector<32x16xf32>
    %21 = arith.subf %13, %18 : vector<32x16xf32>
    %22 = arith.subf %16, %19 : vector<32x16xf32>
    %cst_16 = arith.constant 2.000000e+00 : f32
    %23 = vector.broadcast %cst_16 : f32 to vector<32x16xf32>
    %24 = arith.mulf %23, %19 : vector<32x16xf32>
    %cst_17 = arith.constant 9.99999974E-5 : f32
    %25 = vector.broadcast %cst_17 : f32 to vector<32x16xf32>
    %26 = arith.addf %24, %25 : vector<32x16xf32>
    %cst_18 = arith.constant 2.000000e+00 : f32
    %27 = vector.broadcast %cst_18 : f32 to vector<32x16xf32>
    %28 = arith.mulf %27, %22 : vector<32x16xf32>
    %cst_19 = arith.constant 8.99999984E-4 : f32
    %29 = vector.broadcast %cst_19 : f32 to vector<32x16xf32>
    %30 = arith.addf %28, %29 : vector<32x16xf32>
    %31 = arith.mulf %26, %30 : vector<32x16xf32>
    %32 = arith.addf %17, %18 : vector<32x16xf32>
    %cst_20 = arith.constant 9.99999974E-5 : f32
    %33 = vector.broadcast %cst_20 : f32 to vector<32x16xf32>
    %34 = arith.addf %32, %33 : vector<32x16xf32>
    %35 = arith.addf %20, %21 : vector<32x16xf32>
    %cst_21 = arith.constant 8.99999984E-4 : f32
    %36 = vector.broadcast %cst_21 : f32 to vector<32x16xf32>
    %37 = arith.addf %35, %36 : vector<32x16xf32>
    %38 = arith.mulf %34, %37 : vector<32x16xf32>
    %39 = tpu.reciprocal %38 : vector<32x16xf32> -> vector<32x16xf32>
    %40 = arith.mulf %31, %39 : vector<32x16xf32>
    %41 = vector.shape_cast %40 : vector<32x16xf32> to vector<1x32x16xf32>
    %cst_22 = arith.constant dense<0.000000e+00> : vector<1xf32>
    %42 = vector.multi_reduction <add>, %41, %cst_22 [1, 2] : vector<1x32x16xf32> to vector<1xf32>
    %43 = vector.shape_cast %42 : vector<1xf32> to vector<1x1x1xf32>
    %44 = vector.extract %43[0, 0, 0] : f32 from vector<1x1x1xf32>
    %cst_23 = arith.constant 0.000000e+00 : f32
    %45 = vector.broadcast %cst_23 : f32 to vector<1x8x128xf32>
    %46 = vector.broadcast %44 : f32 to vector<1x8x128xf32>
    %47 = arith.addf %45, %46 : vector<1x8x128xf32>
    %c0_24 = arith.constant 0 : index
    %c0_25 = arith.constant 0 : index
    %c0_26 = arith.constant 0 : index
    %48 = vector.load %arg5[%c0_24, %c0_25, %c0_26] : memref<1x8x128xf32, #tpu.memory_space<vmem>>, vector<1x8x128xf32>
    tpu.vector_store %arg5[%c0_24, %c0_25, %c0_26], %47 {strides = array<i32>} : memref<1x8x128xf32, #tpu.memory_space<vmem>>, vector<1x8x128xf32>,
    return
  }
  func.func @transform_0(%arg0: i32) -> (i32, i32) {
    %c0_i32 = arith.constant 0 : i32
    %c0_i32_0 = arith.constant 0 : i32
    return %arg0, %c0_i32 : i32, i32
  }
  func.func @transform_1(%arg0: i32) -> (i32, i32) {
    %c0_i32 = arith.constant 0 : i32
    %c0_i32_0 = arith.constant 0 : i32
    return %arg0, %c0_i32 : i32, i32
  }
  func.func @transform_2(%arg0: i32) -> (i32, i32) {
    %c0_i32 = arith.constant 0 : i32
    %c0_i32_0 = arith.constant 0 : i32
    %c0_i32_1 = arith.constant 0 : i32
    return %c0_i32, %c0_i32_0 : i32, i32
  }
  func.func @transform_3(%arg0: i32) -> (i32, i32) {
    %c0_i32 = arith.constant 0 : i32
    %c0_i32_0 = arith.constant 0 : i32
    %c0_i32_1 = arith.constant 0 : i32
    return %c0_i32, %c0_i32_0 : i32, i32
  }
  func.func @transform_4(%arg0: i32) -> (i32, i32, i32) {
    %c0_i32 = arith.constant 0 : i32
    %c0_i32_0 = arith.constant 0 : i32
    %c0_i32_1 = arith.constant 0 : i32
    return %arg0, %c0_i32, %c0_i32_0 : i32, i32, i32
  }
}

</mosaic_0001>

<llo_original>
// kernel: ssim_loss.1
$region0: #{ssim_loss.1}
  #allocation0 [shape = 'u32[]', space=smem, size = 0x4, offset = 0x4, fixed_abs, tag = 'smem constant byte address 0x4 - core index']
  #allocation1 [shape = 'u32[144,128]{1,0:T(1,128)}', space=vmem, size = 0x12000, scoped, tag = 'internal scratch']
  %s0 = inlined_call_operand.vmem [shape: f32[32,16], index: 0, kind: input, shape index: {}]
  %s1 = inlined_call_operand.hbm [shape: f32[32,16], index: 1, kind: input, shape index: {}]
  %s2 = inlined_call_operand.vmem [shape: f32[16,16], index: 2, kind: input, shape index: {}]
  %s3 = inlined_call_operand.vmem [shape: f32[32,32], index: 3, kind: input, shape index: {}]
  %s4 = inlined_call_operand.vmem [shape: f32[1,8,128], index: 4, kind: output, shape index: {}]
  %s5 = sld [smem:[#allocation0]]
  $region30: #{ssim_loss.1} parent=0
    _
  %s7 = ssub.s32 1, %s5
  %s8 = scalar_select 0, %s7, %s5
  $region1: #{ssim_loss.1} parent=0
    #allocation2 [shape = 'u8[16384]{0}', space=vmem, size = 0x4000, scoped, tag = 'input window, operand 1, single buffered']
    #allocation3 [shape = 's32[1]{0}', space=sflag, size = 0x4, scoped, tag = 'scoped memory for ssim_loss.1']
    %9 = vsyncpa [#allocation3], 0
    // Predicated region
    $region2: #{ssim_loss.1} parent=1 // pred_check
      _
    $region3: #{ssim_loss.1} parent=1 // pred_check_branch
      %11 = sbr.rel (0) target = $region5
    $region4: #{ssim_loss.1} parent=1 // pred_region
      _
    $region5: #{ssim_loss.1} parent=1 // pred_fallthru
      _
    // Predicated region
    $region6: #{ssim_loss.1} parent=1 // pred_check
      _
    $region7: #{ssim_loss.1} parent=1 // pred_check_branch
      %13 = sbr.rel (0) target = $region9
    $region8: #{ssim_loss.1} parent=1 // pred_region
      %s15 = ssub.s32 512, 512
      %16 = vsyncadd [#allocation3], %s15
      %s17 = sshll.u32 [#allocation2], 4
      %s18 = int_to_ptr.vmem [resolvable:$true] %s17
      %23 = dma.hbm_to_vmem [thread:$0]  %s1, 512, %s18, [#allocation3], 128, 128, 8
    $region9: #{ssim_loss.1} parent=1 // pred_fallthru
      _
    // Predicated region
    $region10: #{ssim_loss.1} parent=1 // pred_check
      _
    $region11: #{ssim_loss.1} parent=1 // pred_check_branch
      %25 = sbr.rel (0) target = $region13
    $region12: #{ssim_loss.1} parent=1 // pred_region
      _
    $region13: #{ssim_loss.1} parent=1 // pred_fallthru
      _
    // Predicated region
    $region14: #{ssim_loss.1} parent=1 // pred_check
      _
    $region15: #{ssim_loss.1} parent=1 // pred_check_branch
      %27 = sbr.rel (0) target = $region17
    $region16: #{ssim_loss.1} parent=1 // pred_region
      _
    $region17: #{ssim_loss.1} parent=1 // pred_fallthru
      _
    // Predicated region
    $region18: #{ssim_loss.1} parent=1 // pred_check
      _
    $region19: #{ssim_loss.1} parent=1 // pred_check_branch
      %29 = sbr.rel (0) target = $region21
    $region20: #{ssim_loss.1} parent=1 // pred_region
      %30 = dma.done [#allocation3], 512
    $region21: #{ssim_loss.1} parent=1 // pred_fallthru
      _
    %v31 = vld [vmem:[%s0] sm:$0xff]
    %v32 = vld [vmem:[%s0 + $0x8] sm:$0xff]
    %v33 = vld [vmem:[%s0 + $0x10] sm:$0xff]
    %v34 = vld [vmem:[%s0 + $0x18] sm:$0xff]
    %v35 = vld [vmem:[#allocation2] sm:$0xff]
    %v36 = vld [vmem:[#allocation2 + $0x8] sm:$0xff]
    %v37 = vld [vmem:[#allocation2 + $0x10] sm:$0xff]
    %v38 = vld [vmem:[#allocation2 + $0x18] sm:$0xff]
    %v39 = vld [vmem:[%s2] sm:$0xff]
    %v40 = vld [vmem:[%s2 + $0x8] sm:$0xff]
    %v41 = vld [vmem:[%s3] sm:$0xff]
    %v42 = vld [vmem:[%s3 + $0x8] sm:$0xff]
    %v43 = vld [vmem:[%s3 + $0x10] sm:$0xff]
    %v44 = vld [vmem:[%s3 + $0x18] sm:$0xff]
    %vm45 = vcmask 130048
    %v47 = vsel %vm45, %v31, 0
    %v50 = vsel %vm45, %v32, 0
    %v53 = vsel %vm45, %v33, 0
    %v56 = vsel %vm45, %v34, 0
    %58 = vmatprep.subr.mxu0 0.0
    %59 = vmatpush1.msra.mxu0 0.0
    %60 = vmatprep.subr.mxu0 0.0
    %61 = vmatpush1.msra.mxu0 0.0
    %62 = vmatprep.subr.mxu0 0.0
    %63 = vmatpush1.msra.mxu0 0.0
    %64 = vmatprep.subr.mxu0 0.0
    %65 = vmatpush1.msra.mxu0 0.0
    %66 = vmatprep.subr.mxu0 0.0
    %67 = vmatpush1.msra.mxu0 0.0
    %68 = vmatprep.subr.mxu0 0.0
    %69 = vmatpush1.msra.mxu0 0.0
    %70 = vmatprep.subr.mxu0 0.0
    %71 = vmatpush1.msra.mxu0 0.0
    %72 = vmatprep.subr.mxu0 0.0
    %73 = vmatpush1.msra.mxu0 0.0
    %74 = vmatprep.subr.mxu0 0.0
    %75 = vmatpush1.msra.mxu0 0.0
    %76 = vmatprep.subr.mxu0 0.0
    %77 = vmatpush1.msra.mxu0 0.0
    %78 = vmatprep.subr.mxu0 0.0
    %79 = vmatpush1.msra.mxu0 0.0
    %80 = vmatprep.subr.mxu0 0.0
    %81 = vmatpush1.msra.mxu0 0.0
    %82 = vmatprep.subr.mxu0 0.0
    %83 = vmatpush1.msra.mxu0 0.0
    %84 = vmatprep.subr.mxu0 0.0
    %85 = vmatpush1.msra.mxu0 0.0
    %86 = vmatprep.subr.mxu0 0.0
    %87 = vmatpush1.msra.mxu0 %v40
    %88 = vmatprep.subr.mxu0 0.0
    %89 = vmatpush1.msra.mxu0 %v39
    %90 = vmatprep.subr.mxu0 0.0
    %91 = vmatpush2.msra.mxu0 0.0
    %92 = vmatprep.subr.mxu0 0.0
    %93 = vmatpush2.msra.mxu0 0.0
    %94 = vmatprep.subr.mxu0 0.0
    %95 = vmatpush2.msra.mxu0 0.0
    %96 = vmatprep.subr.mxu0 0.0
    %97 = vmatpush2.msra.mxu0 0.0
    %98 = vmatprep.subr.mxu0 0.0
    %99 = vmatpush2.msra.mxu0 0.0
    %100 = vmatprep.subr.mxu0 0.0
    %101 = vmatpush2.msra.mxu0 0.0
    %102 = vmatprep.subr.mxu0 0.0
    %103 = vmatpush2.msra.mxu0 0.0
    %104 = vmatprep.subr.mxu0 0.0
    %105 = vmatpush2.msra.mxu0 0.0
    %106 = vmatprep.subr.mxu0 0.0
    %107 = vmatpush2.msra.mxu0 0.0
    %108 = vmatprep.subr.mxu0 0.0
    %109 = vmatpush2.msra.mxu0 0.0
    %110 = vmatprep.subr.mxu0 0.0
    %111 = vmatpush2.msra.mxu0 0.0
    %112 = vmatprep.subr.mxu0 0.0
    %113 = vmatpush2.msra.mxu0 0.0
    %114 = vmatprep.subr.mxu0 0.0
    %115 = vmatpush2.msra.mxu0 0.0
    %116 = vmatprep.subr.mxu0 0.0
    %117 = vmatpush2.msra.mxu0 0.0
    %118 = vmatprep.subr.mxu0 0.0
    %119 = vmatpush2.msra.mxu0 0.0
    %120 = vmatprep.subr.mxu0 0.0
    %121 = vmatpush2.msra.mxu0 0.0
    %122 = vmatprep.mubr.f32.mxu0 0.0
    %123 = vmatmul.mubr.f32.gmra.mxu0 %v47
    %v124 = vpop.f32.mrf.mxu0
    %v125 = vadd.f32 0.0, %v124
    %v126 = vpop.f32.mrf.mxu0
    %127 = vmatprep.mubr.f32.mxu0 0.0
    %128 = vmatmul.mubr.f32.gmra.mxu0 %v50
    %v129 = vpop.f32.mrf.mxu0
    %v130 = vadd.f32 0.0, %v129
    %v131 = vpop.f32.mrf.mxu0
    %132 = vmatprep.mubr.f32.mxu0 0.0
    %133 = vmatmul.mubr.f32.gmra.mxu0 %v53
    %v134 = vpop.f32.mrf.mxu0
    %v135 = vadd.f32 0.0, %v134
    %v136 = vpop.f32.mrf.mxu0
    %137 = vmatprep.mubr.f32.mxu0 0.0
    %138 = vmatmul.mubr.f32.gmra.mxu0 %v56
    %v139 = vpop.f32.mrf.mxu0
    %v140 = vadd.f32 0.0, %v139
    %v141 = vpop.f32.mrf.mxu0
    %142 = vdwg.mxu0
    %vm143 = vcmask 261120
    %v145 = vsel %vm143, %v41, 0
    %v148 = vsel %vm143, %v42, 0
    %v151 = vsel %vm143, %v43, 0
    %v154 = vsel %vm143, %v44, 0
    %156 = vmatprep.subr.mxu0 0.0
    %157 = vmatpush1.msra.mxu0 0.0
    %158 = vmatprep.subr.mxu0 0.0
    %159 = vmatpush1.msra.mxu0 0.0
    %160 = vmatprep.subr.mxu0 0.0
    %161 = vmatpush1.msra.mxu0 0.0
    %162 = vmatprep.subr.mxu0 0.0
    %163 = vmatpush1.msra.mxu0 0.0
    %164 = vmatprep.subr.mxu0 0.0
    %165 = vmatpush1.msra.mxu0 0.0
    %166 = vmatprep.subr.mxu0 0.0
    %167 = vmatpush1.msra.mxu0 0.0
    %168 = vmatprep.subr.mxu0 0.0
    %169 = vmatpush1.msra.mxu0 0.0
    %170 = vmatprep.subr.mxu0 0.0
    %171 = vmatpush1.msra.mxu0 0.0
    %172 = vmatprep.subr.mxu0 0.0
    %173 = vmatpush1.msra.mxu0 0.0
    %174 = vmatprep.subr.mxu0 0.0
    %175 = vmatpush1.msra.mxu0 0.0
    %176 = vmatprep.subr.mxu0 0.0
    %177 = vmatpush1.msra.mxu0 0.0
    %178 = vmatprep.subr.mxu0 0.0
    %179 = vmatpush1.msra.mxu0 0.0
    %180 = vmatprep.subr.mxu0 0.0
    %181 = vmatpush1.msra.mxu0 %v140
    %182 = vmatprep.subr.mxu0 0.0
    %183 = vmatpush1.msra.mxu0 %v135
    %184 = vmatprep.subr.mxu0 0.0
    %185 = vmatpush1.msra.mxu0 %v130
    %186 = vmatprep.subr.mxu0 0.0
    %187 = vmatpush1.msra.mxu0 %v125
    %188 = vmatprep.subr.mxu0 0.0
    %189 = vmatpush2.msra.mxu0 0.0
    %190 = vmatprep.subr.mxu0 0.0
    %191 = vmatpush2.msra.mxu0 0.0
    %192 = vmatprep.subr.mxu0 0.0
    %193 = vmatpush2.msra.mxu0 0.0
    %194 = vmatprep.subr.mxu0 0.0
    %195 = vmatpush2.msra.mxu0 0.0
    %196 = vmatprep.subr.mxu0 0.0
    %197 = vmatpush2.msra.mxu0 0.0
    %198 = vmatprep.subr.mxu0 0.0
    %199 = vmatpush2.msra.mxu0 0.0
    %200 = vmatprep.subr.mxu0 0.0
    %201 = vmatpush2.msra.mxu0 0.0
    %202 = vmatprep.subr.mxu0 0.0
    %203 = vmatpush2.msra.mxu0 0.0
    %204 = vmatprep.subr.mxu0 0.0
    %205 = vmatpush2.msra.mxu0 0.0
    %206 = vmatprep.subr.mxu0 0.0
    %207 = vmatpush2.msra.mxu0 0.0
    %208 = vmatprep.subr.mxu0 0.0
    %209 = vmatpush2.msra.mxu0 0.0
    %210 = vmatprep.subr.mxu0 0.0
    %211 = vmatpush2.msra.mxu0 0.0
    %212 = vmatprep.subr.mxu0 0.0
    %213 = vmatpush2.msra.mxu0 0.0
    %214 = vmatprep.subr.mxu0 0.0
    %215 = vmatpush2.msra.mxu0 0.0
    %216 = vmatprep.subr.mxu0 0.0
    %217 = vmatpush2.msra.mxu0 0.0
    %218 = vmatprep.subr.mxu0 0.0
    %219 = vmatpush2.msra.mxu0 0.0
    %220 = vmatprep.mubr.f32.mxu0 0.0
    %221 = vmatmul.mubr.f32.gmra.mxu0 %v145
    %v222 = vpop.f32.mrf.mxu0
    %v223 = vadd.f32 0.0, %v222
    %v224 = vpop.f32.mrf.mxu0
    %225 = vmatprep.mubr.f32.mxu0 0.0
    %226 = vmatmul.mubr.f32.gmra.mxu0 %v148
    %v227 = vpop.f32.mrf.mxu0
    %v228 = vadd.f32 0.0, %v227
    %v229 = vpop.f32.mrf.mxu0
    %230 = vmatprep.mubr.f32.mxu0 0.0
    %231 = vmatmul.mubr.f32.gmra.mxu0 %v151
    %v232 = vpop.f32.mrf.mxu0
    %v233 = vadd.f32 0.0, %v232
    %v234 = vpop.f32.mrf.mxu0
    %235 = vmatprep.mubr.f32.mxu0 0.0
    %236 = vmatmul.mubr.f32.gmra.mxu0 %v154
    %v237 = vpop.f32.mrf.mxu0
    %v238 = vadd.f32 0.0, %v237
    %v239 = vpop.f32.mrf.mxu0
    %240 = vdwg.mxu0
    %v242 = vsel %vm45, %v35, 0
    %v245 = vsel %vm45, %v36, 0
    %v248 = vsel %vm45, %v37, 0
    %v251 = vsel %vm45, %v38, 0
    %253 = vmatprep.subr.mxu0 0.0
    %254 = vmatpush1.msra.mxu0 0.0
    %255 = vmatprep.subr.mxu0 0.0
    %256 = vmatpush1.msra.mxu0 0.0
    %257 = vmatprep.subr.mxu0 0.0
    %258 = vmatpush1.msra.mxu0 0.0
    %259 = vmatprep.subr.mxu0 0.0
    %260 = vmatpush1.msra.mxu0 0.0
    %261 = vmatprep.subr.mxu0 0.0
    %262 = vmatpush1.msra.mxu0 0.0
    %263 = vmatprep.subr.mxu0 0.0
    %264 = vmatpush1.msra.mxu0 0.0
    %265 = vmatprep.subr.mxu0 0.0
    %266 = vmatpush1.msra.mxu0 0.0
    %267 = vmatprep.subr.mxu0 0.0
    %268 = vmatpush1.msra.mxu0 0.0
    %269 = vmatprep.subr.mxu0 0.0
    %270 = vmatpush1.msra.mxu0 0.0
    %271 = vmatprep.subr.mxu0 0.0
    %272 = vmatpush1.msra.mxu0 0.0
    %273 = vmatprep.subr.mxu0 0.0
    %274 = vmatpush1.msra.mxu0 0.0
    %275 = vmatprep.subr.mxu0 0.0
    %276 = vmatpush1.msra.mxu0 0.0
    %277 = vmatprep.subr.mxu0 0.0
    %278 = vmatpush1.msra.mxu0 0.0
    %279 = vmatprep.subr.mxu0 0.0
    %280 = vmatpush1.msra.mxu0 0.0
    %281 = vmatprep.subr.mxu0 0.0
    %282 = vmatpush1.msra.mxu0 %v40
    %283 = vmatprep.subr.mxu0 0.0
    %284 = vmatpush1.msra.mxu0 %v39
    %285 = vmatprep.subr.mxu0 0.0
    %286 = vmatpush2.msra.mxu0 0.0
    %287 = vmatprep.subr.mxu0 0.0
    %288 = vmatpush2.msra.mxu0 0.0
    %289 = vmatprep.subr.mxu0 0.0
    %290 = vmatpush2.msra.mxu0 0.0
    %291 = vmatprep.subr.mxu0 0.0
    %292 = vmatpush2.msra.mxu0 0.0
    %293 = vmatprep.subr.mxu0 0.0
    %294 = vmatpush2.msra.mxu0 0.0
    %295 = vmatprep.subr.mxu0 0.0
    %296 = vmatpush2.msra.mxu0 0.0
    %297 = vmatprep.subr.mxu0 0.0
    %298 = vmatpush2.msra.mxu0 0.0
    %299 = vmatprep.subr.mxu0 0.0
    %300 = vmatpush2.msra.mxu0 0.0
    %301 = vmatprep.subr.mxu0 0.0
    %302 = vmatpush2.msra.mxu0 0.0
    %303 = vmatprep.subr.mxu0 0.0
    %304 = vmatpush2.msra.mxu0 0.0
    %305 = vmatprep.subr.mxu0 0.0
    %306 = vmatpush2.msra.mxu0 0.0
    %307 = vmatprep.subr.mxu0 0.0
    %308 = vmatpush2.msra.mxu0 0.0
    %309 = vmatprep.subr.mxu0 0.0
    %310 = vmatpush2.msra.mxu0 0.0
    %311 = vmatprep.subr.mxu0 0.0
    %312 = vmatpush2.msra.mxu0 0.0
    %313 = vmatprep.subr.mxu0 0.0
    %314 = vmatpush2.msra.mxu0 0.0
    %315 = vmatprep.subr.mxu0 0.0
    %316 = vmatpush2.msra.mxu0 0.0
    %317 = vmatprep.mubr.f32.mxu0 0.0
    %318 = vmatmul.mubr.f32.gmra.mxu0 %v242
    %v319 = vpop.f32.mrf.mxu0
    %v320 = vadd.f32 0.0, %v319
    %v321 = vpop.f32.mrf.mxu0
    %322 = vmatprep.mubr.f32.mxu0 0.0
    %323 = vmatmul.mubr.f32.gmra.mxu0 %v245
    %v324 = vpop.f32.mrf.mxu0
    %v325 = vadd.f32 0.0, %v324
    %v326 = vpop.f32.mrf.mxu0
    %327 = vmatprep.mubr.f32.mxu0 0.0
    %328 = vmatmul.mubr.f32.gmra.mxu0 %v248
    %v329 = vpop.f32.mrf.mxu0
    %v330 = vadd.f32 0.0, %v329
    %v331 = vpop.f32.mrf.mxu0
    %332 = vmatprep.mubr.f32.mxu0 0.0
    %333 = vmatmul.mubr.f32.gmra.mxu0 %v251
    %v334 = vpop.f32.mrf.mxu0
    %v335 = vadd.f32 0.0, %v334
    %v336 = vpop.f32.mrf.mxu0
    %337 = vdwg.mxu0
    %338 = vmatprep.subr.mxu0 0.0
    %339 = vmatpush1.msra.mxu0 0.0
    %340 = vmatprep.subr.mxu0 0.0
    %341 = vmatpush1.msra.mxu0 0.0
    %342 = vmatprep.subr.mxu0 0.0
    %343 = vmatpush1.msra.mxu0 0.0
    %344 = vmatprep.subr.mxu0 0.0
    %345 = vmatpush1.msra.mxu0 0.0
    %346 = vmatprep.subr.mxu0 0.0
    %347 = vmatpush1.msra.mxu0 0.0
    %348 = vmatprep.subr.mxu0 0.0
    %349 = vmatpush1.msra.mxu0 0.0
    %350 = vmatprep.subr.mxu0 0.0
    %351 = vmatpush1.msra.mxu0 0.0
    %352 = vmatprep.subr.mxu0 0.0
    %353 = vmatpush1.msra.mxu0 0.0
    %354 = vmatprep.subr.mxu0 0.0
    %355 = vmatpush1.msra.mxu0 0.0
    %356 = vmatprep.subr.mxu0 0.0
    %357 = vmatpush1.msra.mxu0 0.0
    %358 = vmatprep.subr.mxu0 0.0
    %359 = vmatpush1.msra.mxu0 0.0
    %360 = vmatprep.subr.mxu0 0.0
    %361 = vmatpush1.msra.mxu0 0.0
    %362 = vmatprep.subr.mxu0 0.0
    %363 = vmatpush1.msra.mxu0 %v335
    %364 = vmatprep.subr.mxu0 0.0
    %365 = vmatpush1.msra.mxu0 %v330
    %366 = vmatprep.subr.mxu0 0.0
    %367 = vmatpush1.msra.mxu0 %v325
    %368 = vmatprep.subr.mxu0 0.0
    %369 = vmatpush1.msra.mxu0 %v320
    %370 = vmatprep.subr.mxu0 0.0
    %371 = vmatpush2.msra.mxu0 0.0
    %372 = vmatprep.subr.mxu0 0.0
    %373 = vmatpush2.msra.mxu0 0.0
    %374 = vmatprep.subr.mxu0 0.0
    %375 = vmatpush2.msra.mxu0 0.0
    %376 = vmatprep.subr.mxu0 0.0
    %377 = vmatpush2.msra.mxu0 0.0
    %378 = vmatprep.subr.mxu0 0.0
    %379 = vmatpush2.msra.mxu0 0.0
    %380 = vmatprep.subr.mxu0 0.0
    %381 = vmatpush2.msra.mxu0 0.0
    %382 = vmatprep.subr.mxu0 0.0
    %383 = vmatpush2.msra.mxu0 0.0
    %384 = vmatprep.subr.mxu0 0.0
    %385 = vmatpush2.msra.mxu0 0.0
    %386 = vmatprep.subr.mxu0 0.0
    %387 = vmatpush2.msra.mxu0 0.0
    %388 = vmatprep.subr.mxu0 0.0
    %389 = vmatpush2.msra.mxu0 0.0
    %390 = vmatprep.subr.mxu0 0.0
    %391 = vmatpush2.msra.mxu0 0.0
    %392 = vmatprep.subr.mxu0 0.0
    %393 = vmatpush2.msra.mxu0 0.0
    %394 = vmatprep.subr.mxu0 0.0
    %395 = vmatpush2.msra.mxu0 0.0
    %396 = vmatprep.subr.mxu0 0.0
    %397 = vmatpush2.msra.mxu0 0.0
    %398 = vmatprep.subr.mxu0 0.0
    %399 = vmatpush2.msra.mxu0 0.0
    %400 = vmatprep.subr.mxu0 0.0
    %401 = vmatpush2.msra.mxu0 0.0
    %402 = vmatprep.mubr.f32.mxu0 0.0
    %403 = vmatmul.mubr.f32.gmra.mxu0 %v145
    %v404 = vpop.f32.mrf.mxu0
    %v405 = vadd.f32 0.0, %v404
    %v406 = vpop.f32.mrf.mxu0
    %407 = vmatprep.mubr.f32.mxu0 0.0
    %408 = vmatmul.mubr.f32.gmra.mxu0 %v148
    %v409 = vpop.f32.mrf.mxu0
    %v410 = vadd.f32 0.0, %v409
    %v411 = vpop.f32.mrf.mxu0
    %412 = vmatprep.mubr.f32.mxu0 0.0
    %413 = vmatmul.mubr.f32.gmra.mxu0 %v151
    %v414 = vpop.f32.mrf.mxu0
    %v415 = vadd.f32 0.0, %v414
    %v416 = vpop.f32.mrf.mxu0
    %417 = vmatprep.mubr.f32.mxu0 0.0
    %418 = vmatmul.mubr.f32.gmra.mxu0 %v154
    %v419 = vpop.f32.mrf.mxu0
    %v420 = vadd.f32 0.0, %v419
    %v421 = vpop.f32.mrf.mxu0
    %422 = vdwg.mxu0
    %v423 = vmul.f32 %v31, %v31
    %v424 = vmul.f32 %v32, %v32
    %v425 = vmul.f32 %v33, %v33
    %v426 = vmul.f32 %v34, %v34
    %v428 = vsel %vm45, %v423, 0
    %v431 = vsel %vm45, %v424, 0
    %v434 = vsel %vm45, %v425, 0
    %v437 = vsel %vm45, %v426, 0
    %439 = vmatprep.subr.mxu0 0.0
    %440 = vmatpush1.msra.mxu0 0.0
    %441 = vmatprep.subr.mxu0 0.0
    %442 = vmatpush1.msra.mxu0 0.0
    %443 = vmatprep.subr.mxu0 0.0
    %444 = vmatpush1.msra.mxu0 0.0
    %445 = vmatprep.subr.mxu0 0.0
    %446 = vmatpush1.msra.mxu0 0.0
    %447 = vmatprep.subr.mxu0 0.0
    %448 = vmatpush1.msra.mxu0 0.0
    %449 = vmatprep.subr.mxu0 0.0
    %450 = vmatpush1.msra.mxu0 0.0
    %451 = vmatprep.subr.mxu0 0.0
    %452 = vmatpush1.msra.mxu0 0.0
    %453 = vmatprep.subr.mxu0 0.0
    %454 = vmatpush1.msra.mxu0 0.0
    %455 = vmatprep.subr.mxu0 0.0
    %456 = vmatpush1.msra.mxu0 0.0
    %457 = vmatprep.subr.mxu0 0.0
    %458 = vmatpush1.msra.mxu0 0.0
    %459 = vmatprep.subr.mxu0 0.0
    %460 = vmatpush1.msra.mxu0 0.0
    %461 = vmatprep.subr.mxu0 0.0
    %462 = vmatpush1.msra.mxu0 0.0
    %463 = vmatprep.subr.mxu0 0.0
    %464 = vmatpush1.msra.mxu0 0.0
    %465 = vmatprep.subr.mxu0 0.0
    %466 = vmatpush1.msra.mxu0 0.0
    %467 = vmatprep.subr.mxu0 0.0
    %468 = vmatpush1.msra.mxu0 %v40
    %469 = vmatprep.subr.mxu0 0.0
    %470 = vmatpush1.msra.mxu0 %v39
    %471 = vmatprep.subr.mxu0 0.0
    %472 = vmatpush2.msra.mxu0 0.0
    %473 = vmatprep.subr.mxu0 0.0
    %474 = vmatpush2.msra.mxu0 0.0
    %475 = vmatprep.subr.mxu0 0.0
    %476 = vmatpush2.msra.mxu0 0.0
    %477 = vmatprep.subr.mxu0 0.0
    %478 = vmatpush2.msra.mxu0 0.0
    %479 = vmatprep.subr.mxu0 0.0
    %480 = vmatpush2.msra.mxu0 0.0
    %481 = vmatprep.subr.mxu0 0.0
    %482 = vmatpush2.msra.mxu0 0.0
    %483 = vmatprep.subr.mxu0 0.0
    %484 = vmatpush2.msra.mxu0 0.0
    %485 = vmatprep.subr.mxu0 0.0
    %486 = vmatpush2.msra.mxu0 0.0
    %487 = vmatprep.subr.mxu0 0.0
    %488 = vmatpush2.msra.mxu0 0.0
    %489 = vmatprep.subr.mxu0 0.0
    %490 = vmatpush2.msra.mxu0 0.0
    %491 = vmatprep.subr.mxu0 0.0
    %492 = vmatpush2.msra.mxu0 0.0
    %493 = vmatprep.subr.mxu0 0.0
    %494 = vmatpush2.msra.mxu0 0.0
    %495 = vmatprep.subr.mxu0 0.0
    %496 = vmatpush2.msra.mxu0 0.0
    %497 = vmatprep.subr.mxu0 0.0
    %498 = vmatpush2.msra.mxu0 0.0
    %499 = vmatprep.subr.mxu0 0.0
    %500 = vmatpush2.msra.mxu0 0.0
    %501 = vmatprep.subr.mxu0 0.0
    %502 = vmatpush2.msra.mxu0 0.0
    %503 = vmatprep.mubr.f32.mxu0 0.0
    %504 = vmatmul.mubr.f32.gmra.mxu0 %v428
    %v505 = vpop.f32.mrf.mxu0
    %v506 = vadd.f32 0.0, %v505
    %v507 = vpop.f32.mrf.mxu0
    %508 = vmatprep.mubr.f32.mxu0 0.0
    %509 = vmatmul.mubr.f32.gmra.mxu0 %v431
    %v510 = vpop.f32.mrf.mxu0
    %v511 = vadd.f32 0.0, %v510
    %v512 = vpop.f32.mrf.mxu0
    %513 = vmatprep.mubr.f32.mxu0 0.0
    %514 = vmatmul.mubr.f32.gmra.mxu0 %v434
    %v515 = vpop.f32.mrf.mxu0
    %v516 = vadd.f32 0.0, %v515
    %v517 = vpop.f32.mrf.mxu0
    %518 = vmatprep.mubr.f32.mxu0 0.0
    %519 = vmatmul.mubr.f32.gmra.mxu0 %v437
    %v520 = vpop.f32.mrf.mxu0
    %v521 = vadd.f32 0.0, %v520
    %v522 = vpop.f32.mrf.mxu0
    %523 = vdwg.mxu0
    %524 = vmatprep.subr.mxu0 0.0
    %525 = vmatpush1.msra.mxu0 0.0
    %526 = vmatprep.subr.mxu0 0.0
    %527 = vmatpush1.msra.mxu0 0.0
    %528 = vmatprep.subr.mxu0 0.0
    %529 = vmatpush1.msra.mxu0 0.0
    %530 = vmatprep.subr.mxu0 0.0
    %531 = vmatpush1.msra.mxu0 0.0
    %532 = vmatprep.subr.mxu0 0.0
    %533 = vmatpush1.msra.mxu0 0.0
    %534 = vmatprep.subr.mxu0 0.0
    %535 = vmatpush1.msra.mxu0 0.0
    %536 = vmatprep.subr.mxu0 0.0
    %537 = vmatpush1.msra.mxu0 0.0
    %538 = vmatprep.subr.mxu0 0.0
    %539 = vmatpush1.msra.mxu0 0.0
    %540 = vmatprep.subr.mxu0 0.0
    %541 = vmatpush1.msra.mxu0 0.0
    %542 = vmatprep.subr.mxu0 0.0
    %543 = vmatpush1.msra.mxu0 0.0
    %544 = vmatprep.subr.mxu0 0.0
    %545 = vmatpush1.msra.mxu0 0.0
    %546 = vmatprep.subr.mxu0 0.0
    %547 = vmatpush1.msra.mxu0 0.0
    %548 = vmatprep.subr.mxu0 0.0
    %549 = vmatpush1.msra.mxu0 %v521
    %550 = vmatprep.subr.mxu0 0.0
    %551 = vmatpush1.msra.mxu0 %v516
    %552 = vmatprep.subr.mxu0 0.0
    %553 = vmatpush1.msra.mxu0 %v511
    %554 = vmatprep.subr.mxu0 0.0
    %555 = vmatpush1.msra.mxu0 %v506
    %556 = vmatprep.subr.mxu0 0.0
    %557 = vmatpush2.msra.mxu0 0.0
    %558 = vmatprep.subr.mxu0 0.0
    %559 = vmatpush2.msra.mxu0 0.0
    %560 = vmatprep.subr.mxu0 0.0
    %561 = vmatpush2.msra.mxu0 0.0
    %562 = vmatprep.subr.mxu0 0.0
    %563 = vmatpush2.msra.mxu0 0.0
    %564 = vmatprep.subr.mxu0 0.0
    %565 = vmatpush2.msra.mxu0 0.0
    %566 = vmatprep.subr.mxu0 0.0
    %567 = vmatpush2.msra.mxu0 0.0
    %568 = vmatprep.subr.mxu0 0.0
    %569 = vmatpush2.msra.mxu0 0.0
    %570 = vmatprep.subr.mxu0 0.0
    %571 = vmatpush2.msra.mxu0 0.0
    %572 = vmatprep.subr.mxu0 0.0
    %573 = vmatpush2.msra.mxu0 0.0
    %574 = vmatprep.subr.mxu0 0.0
    %575 = vmatpush2.msra.mxu0 0.0
    %576 = vmatprep.subr.mxu0 0.0
    %577 = vmatpush2.msra.mxu0 0.0
    %578 = vmatprep.subr.mxu0 0.0
    %579 = vmatpush2.msra.mxu0 0.0
    %580 = vmatprep.subr.mxu0 0.0
    %581 = vmatpush2.msra.mxu0 0.0
    %582 = vmatprep.subr.mxu0 0.0
    %583 = vmatpush2.msra.mxu0 0.0
    %584 = vmatprep.subr.mxu0 0.0
    %585 = vmatpush2.msra.mxu0 0.0
    %586 = vmatprep.subr.mxu0 0.0
    %587 = vmatpush2.msra.mxu0 0.0
    %588 = vmatprep.mubr.f32.mxu0 0.0
    %589 = vmatmul.mubr.f32.gmra.mxu0 %v145
    %v590 = vpop.f32.mrf.mxu0
    %v591 = vadd.f32 0.0, %v590
    %v592 = vpop.f32.mrf.mxu0
    %593 = vmatprep.mubr.f32.mxu0 0.0
    %594 = vmatmul.mubr.f32.gmra.mxu0 %v148
    %v595 = vpop.f32.mrf.mxu0
    %v596 = vadd.f32 0.0, %v595
    %v597 = vpop.f32.mrf.mxu0
    %598 = vmatprep.mubr.f32.mxu0 0.0
    %599 = vmatmul.mubr.f32.gmra.mxu0 %v151
    %v600 = vpop.f32.mrf.mxu0
    %v601 = vadd.f32 0.0, %v600
    %v602 = vpop.f32.mrf.mxu0
    %603 = vmatprep.mubr.f32.mxu0 0.0
    %604 = vmatmul.mubr.f32.gmra.mxu0 %v154
    %v605 = vpop.f32.mrf.mxu0
    %v606 = vadd.f32 0.0, %v605
    %v607 = vpop.f32.mrf.mxu0
    %608 = vdwg.mxu0
    %v609 = vmul.f32 %v35, %v35
    %v610 = vmul.f32 %v36, %v36
    %v611 = vmul.f32 %v37, %v37
    %v612 = vmul.f32 %v38, %v38
    %v614 = vsel %vm45, %v609, 0
    %v617 = vsel %vm45, %v610, 0
    %v620 = vsel %vm45, %v611, 0
    %v623 = vsel %vm45, %v612, 0
    %625 = vmatprep.subr.mxu0 0.0
    %626 = vmatpush1.msra.mxu0 0.0
    %627 = vmatprep.subr.mxu0 0.0
    %628 = vmatpush1.msra.mxu0 0.0
    %629 = vmatprep.subr.mxu0 0.0
    %630 = vmatpush1.msra.mxu0 0.0
    %631 = vmatprep.subr.mxu0 0.0
    %632 = vmatpush1.msra.mxu0 0.0
    %633 = vmatprep.subr.mxu0 0.0
    %634 = vmatpush1.msra.mxu0 0.0
    %635 = vmatprep.subr.mxu0 0.0
    %636 = vmatpush1.msra.mxu0 0.0
    %637 = vmatprep.subr.mxu0 0.0
    %638 = vmatpush1.msra.mxu0 0.0
    %639 = vmatprep.subr.mxu0 0.0
    %640 = vmatpush1.msra.mxu0 0.0
    %641 = vmatprep.subr.mxu0 0.0
    %642 = vmatpush1.msra.mxu0 0.0
    %643 = vmatprep.subr.mxu0 0.0
    %644 = vmatpush1.msra.mxu0 0.0
    %645 = vmatprep.subr.mxu0 0.0
    %646 = vmatpush1.msra.mxu0 0.0
    %647 = vmatprep.subr.mxu0 0.0
    %648 = vmatpush1.msra.mxu0 0.0
    %649 = vmatprep.subr.mxu0 0.0
    %650 = vmatpush1.msra.mxu0 0.0
    %651 = vmatprep.subr.mxu0 0.0
    %652 = vmatpush1.msra.mxu0 0.0
    %653 = vmatprep.subr.mxu0 0.0
    %654 = vmatpush1.msra.mxu0 %v40
    %655 = vmatprep.subr.mxu0 0.0
    %656 = vmatpush1.msra.mxu0 %v39
    %657 = vmatprep.subr.mxu0 0.0
    %658 = vmatpush2.msra.mxu0 0.0
    %659 = vmatprep.subr.mxu0 0.0
    %660 = vmatpush2.msra.mxu0 0.0
    %661 = vmatprep.subr.mxu0 0.0
    %662 = vmatpush2.msra.mxu0 0.0
    %663 = vmatprep.subr.mxu0 0.0
    %664 = vmatpush2.msra.mxu0 0.0
    %665 = vmatprep.subr.mxu0 0.0
    %666 = vmatpush2.msra.mxu0 0.0
    %667 = vmatprep.subr.mxu0 0.0
    %668 = vmatpush2.msra.mxu0 0.0
    %669 = vmatprep.subr.mxu0 0.0
    %670 = vmatpush2.msra.mxu0 0.0
    %671 = vmatprep.subr.mxu0 0.0
    %672 = vmatpush2.msra.mxu0 0.0
    %673 = vmatprep.subr.mxu0 0.0
    %674 = vmatpush2.msra.mxu0 0.0
    %675 = vmatprep.subr.mxu0 0.0
    %676 = vmatpush2.msra.mxu0 0.0
    %677 = vmatprep.subr.mxu0 0.0
    %678 = vmatpush2.msra.mxu0 0.0
    %679 = vmatprep.subr.mxu0 0.0
    %680 = vmatpush2.msra.mxu0 0.0
    %681 = vmatprep.subr.mxu0 0.0
    %682 = vmatpush2.msra.mxu0 0.0
    %683 = vmatprep.subr.mxu0 0.0
    %684 = vmatpush2.msra.mxu0 0.0
    %685 = vmatprep.subr.mxu0 0.0
    %686 = vmatpush2.msra.mxu0 0.0
    %687 = vmatprep.subr.mxu0 0.0
    %688 = vmatpush2.msra.mxu0 0.0
    %689 = vmatprep.mubr.f32.mxu0 0.0
    %690 = vmatmul.mubr.f32.gmra.mxu0 %v614
    %v691 = vpop.f32.mrf.mxu0
    %v692 = vadd.f32 0.0, %v691
    %v693 = vpop.f32.mrf.mxu0
    %694 = vmatprep.mubr.f32.mxu0 0.0
    %695 = vmatmul.mubr.f32.gmra.mxu0 %v617
    %v696 = vpop.f32.mrf.mxu0
    %v697 = vadd.f32 0.0, %v696
    %v698 = vpop.f32.mrf.mxu0
    %699 = vmatprep.mubr.f32.mxu0 0.0
    %700 = vmatmul.mubr.f32.gmra.mxu0 %v620
    %v701 = vpop.f32.mrf.mxu0
    %v702 = vadd.f32 0.0, %v701
    %v703 = vpop.f32.mrf.mxu0
    %704 = vmatprep.mubr.f32.mxu0 0.0
    %705 = vmatmul.mubr.f32.gmra.mxu0 %v623
    %v706 = vpop.f32.mrf.mxu0
    %v707 = vadd.f32 0.0, %v706
    %v708 = vpop.f32.mrf.mxu0
    %709 = vdwg.mxu0
    %710 = vmatprep.subr.mxu0 0.0
    %711 = vmatpush1.msra.mxu0 0.0
    %712 = vmatprep.subr.mxu0 0.0
    %713 = vmatpush1.msra.mxu0 0.0
    %714 = vmatprep.subr.mxu0 0.0
    %715 = vmatpush1.msra.mxu0 0.0
    %716 = vmatprep.subr.mxu0 0.0
    %717 = vmatpush1.msra.mxu0 0.0
    %718 = vmatprep.subr.mxu0 0.0
    %719 = vmatpush1.msra.mxu0 0.0
    %720 = vmatprep.subr.mxu0 0.0
    %721 = vmatpush1.msra.mxu0 0.0
    %722 = vmatprep.subr.mxu0 0.0
    %723 = vmatpush1.msra.mxu0 0.0
    %724 = vmatprep.subr.mxu0 0.0
    %725 = vmatpush1.msra.mxu0 0.0
    %726 = vmatprep.subr.mxu0 0.0
    %727 = vmatpush1.msra.mxu0 0.0
    %728 = vmatprep.subr.mxu0 0.0
    %729 = vmatpush1.msra.mxu0 0.0
    %730 = vmatprep.subr.mxu0 0.0
    %731 = vmatpush1.msra.mxu0 0.0
    %732 = vmatprep.subr.mxu0 0.0
    %733 = vmatpush1.msra.mxu0 0.0
    %734 = vmatprep.subr.mxu0 0.0
    %735 = vmatpush1.msra.mxu0 %v707
    %736 = vmatprep.subr.mxu0 0.0
    %737 = vmatpush1.msra.mxu0 %v702
    %738 = vmatprep.subr.mxu0 0.0
    %739 = vmatpush1.msra.mxu0 %v697
    %740 = vmatprep.subr.mxu0 0.0
    %741 = vmatpush1.msra.mxu0 %v692
    %742 = vmatprep.subr.mxu0 0.0
    %743 = vmatpush2.msra.mxu0 0.0
    %744 = vmatprep.subr.mxu0 0.0
    %745 = vmatpush2.msra.mxu0 0.0
    %746 = vmatprep.subr.mxu0 0.0
    %747 = vmatpush2.msra.mxu0 0.0
    %748 = vmatprep.subr.mxu0 0.0
    %749 = vmatpush2.msra.mxu0 0.0
    %750 = vmatprep.subr.mxu0 0.0
    %751 = vmatpush2.msra.mxu0 0.0
    %752 = vmatprep.subr.mxu0 0.0
    %753 = vmatpush2.msra.mxu0 0.0
    %754 = vmatprep.subr.mxu0 0.0
    %755 = vmatpush2.msra.mxu0 0.0
    %756 = vmatprep.subr.mxu0 0.0
    %757 = vmatpush2.msra.mxu0 0.0
    %758 = vmatprep.subr.mxu0 0.0
    %759 = vmatpush2.msra.mxu0 0.0
    %760 = vmatprep.subr.mxu0 0.0
    %761 = vmatpush2.msra.mxu0 0.0
    %762 = vmatprep.subr.mxu0 0.0
    %763 = vmatpush2.msra.mxu0 0.0
    %764 = vmatprep.subr.mxu0 0.0
    %765 = vmatpush2.msra.mxu0 0.0
    %766 = vmatprep.subr.mxu0 0.0
    %767 = vmatpush2.msra.mxu0 0.0
    %768 = vmatprep.subr.mxu0 0.0
    %769 = vmatpush2.msra.mxu0 0.0
    %770 = vmatprep.subr.mxu0 0.0
    %771 = vmatpush2.msra.mxu0 0.0
    %772 = vmatprep.subr.mxu0 0.0
    %773 = vmatpush2.msra.mxu0 0.0
    %774 = vmatprep.mubr.f32.mxu0 0.0
    %775 = vmatmul.mubr.f32.gmra.mxu0 %v145
    %v776 = vpop.f32.mrf.mxu0
    %v777 = vadd.f32 0.0, %v776
    %v778 = vpop.f32.mrf.mxu0
    %779 = vmatprep.mubr.f32.mxu0 0.0
    %780 = vmatmul.mubr.f32.gmra.mxu0 %v148
    %v781 = vpop.f32.mrf.mxu0
    %v782 = vadd.f32 0.0, %v781
    %v783 = vpop.f32.mrf.mxu0
    %784 = vmatprep.mubr.f32.mxu0 0.0
    %785 = vmatmul.mubr.f32.gmra.mxu0 %v151
    %v786 = vpop.f32.mrf.mxu0
    %v787 = vadd.f32 0.0, %v786
    %v788 = vpop.f32.mrf.mxu0
    %789 = vmatprep.mubr.f32.mxu0 0.0
    %790 = vmatmul.mubr.f32.gmra.mxu0 %v154
    %v791 = vpop.f32.mrf.mxu0
    %v792 = vadd.f32 0.0, %v791
    %v793 = vpop.f32.mrf.mxu0
    %794 = vdwg.mxu0
    %v795 = vmul.f32 %v31, %v35
    %v796 = vmul.f32 %v32, %v36
    %v797 = vmul.f32 %v33, %v37
    %v798 = vmul.f32 %v34, %v38
    %v800 = vsel %vm45, %v795, 0
    %v803 = vsel %vm45, %v796, 0
    %v806 = vsel %vm45, %v797, 0
    %v809 = vsel %vm45, %v798, 0
    %811 = vmatprep.subr.mxu0 0.0
    %812 = vmatpush1.msra.mxu0 0.0
    %813 = vmatprep.subr.mxu0 0.0
    %814 = vmatpush1.msra.mxu0 0.0
    %815 = vmatprep.subr.mxu0 0.0
    %816 = vmatpush1.msra.mxu0 0.0
    %817 = vmatprep.subr.mxu0 0.0
    %818 = vmatpush1.msra.mxu0 0.0
    %819 = vmatprep.subr.mxu0 0.0
    %820 = vmatpush1.msra.mxu0 0.0
    %821 = vmatprep.subr.mxu0 0.0
    %822 = vmatpush1.msra.mxu0 0.0
    %823 = vmatprep.subr.mxu0 0.0
    %824 = vmatpush1.msra.mxu0 0.0
    %825 = vmatprep.subr.mxu0 0.0
    %826 = vmatpush1.msra.mxu0 0.0
    %827 = vmatprep.subr.mxu0 0.0
    %828 = vmatpush1.msra.mxu0 0.0
    %829 = vmatprep.subr.mxu0 0.0
    %830 = vmatpush1.msra.mxu0 0.0
    %831 = vmatprep.subr.mxu0 0.0
    %832 = vmatpush1.msra.mxu0 0.0
    %833 = vmatprep.subr.mxu0 0.0
    %834 = vmatpush1.msra.mxu0 0.0
    %835 = vmatprep.subr.mxu0 0.0
    %836 = vmatpush1.msra.mxu0 0.0
    %837 = vmatprep.subr.mxu0 0.0
    %838 = vmatpush1.msra.mxu0 0.0
    %839 = vmatprep.subr.mxu0 0.0
    %840 = vmatpush1.msra.mxu0 %v40
    %841 = vmatprep.subr.mxu0 0.0
    %842 = vmatpush1.msra.mxu0 %v39
    %843 = vmatprep.subr.mxu0 0.0
    %844 = vmatpush2.msra.mxu0 0.0
    %845 = vmatprep.subr.mxu0 0.0
    %846 = vmatpush2.msra.mxu0 0.0
    %847 = vmatprep.subr.mxu0 0.0
    %848 = vmatpush2.msra.mxu0 0.0
    %849 = vmatprep.subr.mxu0 0.0
    %850 = vmatpush2.msra.mxu0 0.0
    %851 = vmatprep.subr.mxu0 0.0
    %852 = vmatpush2.msra.mxu0 0.0
    %853 = vmatprep.subr.mxu0 0.0
    %854 = vmatpush2.msra.mxu0 0.0
    %855 = vmatprep.subr.mxu0 0.0
    %856 = vmatpush2.msra.mxu0 0.0
    %857 = vmatprep.subr.mxu0 0.0
    %858 = vmatpush2.msra.mxu0 0.0
    %859 = vmatprep.subr.mxu0 0.0
    %860 = vmatpush2.msra.mxu0 0.0
    %861 = vmatprep.subr.mxu0 0.0
    %862 = vmatpush2.msra.mxu0 0.0
    %863 = vmatprep.subr.mxu0 0.0
    %864 = vmatpush2.msra.mxu0 0.0
    %865 = vmatprep.subr.mxu0 0.0
    %866 = vmatpush2.msra.mxu0 0.0
    %867 = vmatprep.subr.mxu0 0.0
    %868 = vmatpush2.msra.mxu0 0.0
    %869 = vmatprep.subr.mxu0 0.0
    %870 = vmatpush2.msra.mxu0 0.0
    %871 = vmatprep.subr.mxu0 0.0
    %872 = vmatpush2.msra.mxu0 0.0
    %873 = vmatprep.subr.mxu0 0.0
    %874 = vmatpush2.msra.mxu0 0.0
    %875 = vmatprep.mubr.f32.mxu0 0.0
    %876 = vmatmul.mubr.f32.gmra.mxu0 %v800
    %v877 = vpop.f32.mrf.mxu0
    %v878 = vadd.f32 0.0, %v877
    %v879 = vpop.f32.mrf.mxu0
    %880 = vmatprep.mubr.f32.mxu0 0.0
    %881 = vmatmul.mubr.f32.gmra.mxu0 %v803
    %v882 = vpop.f32.mrf.mxu0
    %v883 = vadd.f32 0.0, %v882
    %v884 = vpop.f32.mrf.mxu0
    %885 = vmatprep.mubr.f32.mxu0 0.0
    %886 = vmatmul.mubr.f32.gmra.mxu0 %v806
    %v887 = vpop.f32.mrf.mxu0
    %v888 = vadd.f32 0.0, %v887
    %v889 = vpop.f32.mrf.mxu0
    %890 = vmatprep.mubr.f32.mxu0 0.0
    %891 = vmatmul.mubr.f32.gmra.mxu0 %v809
    %v892 = vpop.f32.mrf.mxu0
    %v893 = vadd.f32 0.0, %v892
    %v894 = vpop.f32.mrf.mxu0
    %895 = vdwg.mxu0
    %896 = vmatprep.subr.mxu0 0.0
    %897 = vmatpush1.msra.mxu0 0.0
    %898 = vmatprep.subr.mxu0 0.0
    %899 = vmatpush1.msra.mxu0 0.0
    %900 = vmatprep.subr.mxu0 0.0
    %901 = vmatpush1.msra.mxu0 0.0
    %902 = vmatprep.subr.mxu0 0.0
    %903 = vmatpush1.msra.mxu0 0.0
    %904 = vmatprep.subr.mxu0 0.0
    %905 = vmatpush1.msra.mxu0 0.0
    %906 = vmatprep.subr.mxu0 0.0
    %907 = vmatpush1.msra.mxu0 0.0
    %908 = vmatprep.subr.mxu0 0.0
    %909 = vmatpush1.msra.mxu0 0.0
    %910 = vmatprep.subr.mxu0 0.0
    %911 = vmatpush1.msra.mxu0 0.0
    %912 = vmatprep.subr.mxu0 0.0
    %913 = vmatpush1.msra.mxu0 0.0
    %914 = vmatprep.subr.mxu0 0.0
    %915 = vmatpush1.msra.mxu0 0.0
    %916 = vmatprep.subr.mxu0 0.0
    %917 = vmatpush1.msra.mxu0 0.0
    %918 = vmatprep.subr.mxu0 0.0
    %919 = vmatpush1.msra.mxu0 0.0
    %920 = vmatprep.subr.mxu0 0.0
    %921 = vmatpush1.msra.mxu0 %v893
    %922 = vmatprep.subr.mxu0 0.0
    %923 = vmatpush1.msra.mxu0 %v888
    %924 = vmatprep.subr.mxu0 0.0
    %925 = vmatpush1.msra.mxu0 %v883
    %926 = vmatprep.subr.mxu0 0.0
    %927 = vmatpush1.msra.mxu0 %v878
    %928 = vmatprep.subr.mxu0 0.0
    %929 = vmatpush2.msra.mxu0 0.0
    %930 = vmatprep.subr.mxu0 0.0
    %931 = vmatpush2.msra.mxu0 0.0
    %932 = vmatprep.subr.mxu0 0.0
    %933 = vmatpush2.msra.mxu0 0.0
    %934 = vmatprep.subr.mxu0 0.0
    %935 = vmatpush2.msra.mxu0 0.0
    %936 = vmatprep.subr.mxu0 0.0
    %937 = vmatpush2.msra.mxu0 0.0
    %938 = vmatprep.subr.mxu0 0.0
    %939 = vmatpush2.msra.mxu0 0.0
    %940 = vmatprep.subr.mxu0 0.0
    %941 = vmatpush2.msra.mxu0 0.0
    %942 = vmatprep.subr.mxu0 0.0
    %943 = vmatpush2.msra.mxu0 0.0
    %944 = vmatprep.subr.mxu0 0.0
    %945 = vmatpush2.msra.mxu0 0.0
    %946 = vmatprep.subr.mxu0 0.0
    %947 = vmatpush2.msra.mxu0 0.0
    %948 = vmatprep.subr.mxu0 0.0
    %949 = vmatpush2.msra.mxu0 0.0
    %950 = vmatprep.subr.mxu0 0.0
    %951 = vmatpush2.msra.mxu0 0.0
    %952 = vmatprep.subr.mxu0 0.0
    %953 = vmatpush2.msra.mxu0 0.0
    %954 = vmatprep.subr.mxu0 0.0
    %955 = vmatpush2.msra.mxu0 0.0
    %956 = vmatprep.subr.mxu0 0.0
    %957 = vmatpush2.msra.mxu0 0.0
    %958 = vmatprep.subr.mxu0 0.0
    %959 = vmatpush2.msra.mxu0 0.0
    %960 = vmatprep.mubr.f32.mxu0 0.0
    %961 = vmatmul.mubr.f32.gmra.mxu0 %v145
    %v962 = vpop.f32.mrf.mxu0
    %v963 = vadd.f32 0.0, %v962
    %v964 = vpop.f32.mrf.mxu0
    %965 = vmatprep.mubr.f32.mxu0 0.0
    %966 = vmatmul.mubr.f32.gmra.mxu0 %v148
    %v967 = vpop.f32.mrf.mxu0
    %v968 = vadd.f32 0.0, %v967
    %v969 = vpop.f32.mrf.mxu0
    %970 = vmatprep.mubr.f32.mxu0 0.0
    %971 = vmatmul.mubr.f32.gmra.mxu0 %v151
    %v972 = vpop.f32.mrf.mxu0
    %v973 = vadd.f32 0.0, %v972
    %v974 = vpop.f32.mrf.mxu0
    %975 = vmatprep.mubr.f32.mxu0 0.0
    %976 = vmatmul.mubr.f32.gmra.mxu0 %v154
    %v977 = vpop.f32.mrf.mxu0
    %v978 = vadd.f32 0.0, %v977
    %v979 = vpop.f32.mrf.mxu0
    %980 = vdwg.mxu0
    %v981 = vmul.f32 %v223, %v223
    %v982 = vmul.f32 %v228, %v228
    %v983 = vmul.f32 %v233, %v233
    %v984 = vmul.f32 %v238, %v238
    %v985 = vmul.f32 %v405, %v405
    %v986 = vmul.f32 %v410, %v410
    %v987 = vmul.f32 %v415, %v415
    %v988 = vmul.f32 %v420, %v420
    %v989 = vmul.f32 %v223, %v405
    %v990 = vmul.f32 %v228, %v410
    %v991 = vmul.f32 %v233, %v415
    %v992 = vmul.f32 %v238, %v420
    %v993 = vsub.f32 %v591, %v981
    %v994 = vsub.f32 %v596, %v982
    %v995 = vsub.f32 %v601, %v983
    %v996 = vsub.f32 %v606, %v984
    %v997 = vsub.f32 %v777, %v985
    %v998 = vsub.f32 %v782, %v986
    %v999 = vsub.f32 %v787, %v987
    %v1000 = vsub.f32 %v792, %v988
    %v1001 = vsub.f32 %v963, %v989
    %v1002 = vsub.f32 %v968, %v990
    %v1003 = vsub.f32 %v973, %v991
    %v1004 = vsub.f32 %v978, %v992
    %v1005 = vmul.f32 %v989, 2.0
    %v1006 = vmul.f32 %v990, 2.0
    %v1007 = vmul.f32 %v991, 2.0
    %v1008 = vmul.f32 %v992, 2.0
    %v1009 = vadd.f32 %v1005, 0.0001
    %v1010 = vadd.f32 %v1006, 0.0001
    %v1011 = vadd.f32 %v1007, 0.0001
    %v1012 = vadd.f32 %v1008, 0.0001
    %v1013 = vmul.f32 %v1001, 2.0
    %v1014 = vmul.f32 %v1002, 2.0
    %v1015 = vmul.f32 %v1003, 2.0
    %v1016 = vmul.f32 %v1004, 2.0
    %v1017 = vadd.f32 %v1013, 0.0009
    %v1018 = vadd.f32 %v1014, 0.0009
    %v1019 = vadd.f32 %v1015, 0.0009
    %v1020 = vadd.f32 %v1016, 0.0009
    %v1021 = vmul.f32 %v1009, %v1017
    %v1022 = vmul.f32 %v1010, %v1018
    %v1023 = vmul.f32 %v1011, %v1019
    %v1024 = vmul.f32 %v1012, %v1020
    %v1025 = vadd.f32 %v981, %v985
    %v1026 = vadd.f32 %v982, %v986
    %v1027 = vadd.f32 %v983, %v987
    %v1028 = vadd.f32 %v984, %v988
    %v1029 = vadd.f32 %v1025, 0.0001
    %v1030 = vadd.f32 %v1026, 0.0001
    %v1031 = vadd.f32 %v1027, 0.0001
    %v1032 = vadd.f32 %v1028, 0.0001
    %v1033 = vadd.f32 %v993, %v997
    %v1034 = vadd.f32 %v994, %v998
    %v1035 = vadd.f32 %v995, %v999
    %v1036 = vadd.f32 %v996, %v1000
    %v1037 = vadd.f32 %v1033, 0.0009
    %v1038 = vadd.f32 %v1034, 0.0009
    %v1039 = vadd.f32 %v1035, 0.0009
    %v1040 = vadd.f32 %v1036, 0.0009
    %v1041 = vmul.f32 %v1029, %v1037
    %v1042 = vmul.f32 %v1030, %v1038
    %v1043 = vmul.f32 %v1031, %v1039
    %v1044 = vmul.f32 %v1032, %v1040
    %v1045 = vrcp.pop %v1041
    %v1046 = vrcp.pop %v1042
    %v1047 = vrcp.pop %v1043
    %v1048 = vrcp.pop %v1044
    %v1049 = vmul.f32 %v1021, %v1045
    %v1050 = vmul.f32 %v1022, %v1046
    %v1051 = vmul.f32 %v1023, %v1047
    %v1052 = vmul.f32 %v1024, %v1048
    %v1053 = vsel %vm45, %v1049, 0.0
    %v1054 = vsel %vm45, %v1050, 0.0
    %v1055 = vadd.f32 %v1053, %v1054
    %v1056 = vsel %vm45, %v1051, 0.0
    %v1057 = vadd.f32 %v1055, %v1056
    %v1058 = vsel %vm45, %v1052, 0.0
    %v1059 = vadd.f32 %v1057, %v1058
    %1060 = vadd.xlane.f32.xlu0 %v1059
    %v1061 = vpop.xlane.xlu0 %1060
    %v1062 = vrot.slane %v1061, 4
    %v1063 = vadd.f32 %v1061, %v1062
    %v1064 = vrot.slane %v1063, 2
    %v1065 = vadd.f32 %v1063, %v1064
    %v1066 = vrot.slane %v1065, 1
    %v1067 = vadd.f32 %v1065, %v1066
    %s1068 = vtos %v1067
    %v1069 = vstv %s1068
    %v1070 = vadd.f32 %v1069, 0.0
    %1071 = vst [vmem:[%s4] sm:$0xff] %v1070
    // Predicated region
    $region22: #{ssim_loss.1} parent=1 // pred_check
      _
    $region23: #{ssim_loss.1} parent=1 // pred_check_branch
      %1073 = sbr.rel (0) target = $region25
    $region24: #{ssim_loss.1} parent=1 // pred_region
      _
    $region25: #{ssim_loss.1} parent=1 // pred_fallthru
      _
    // Predicated region
    $region26: #{ssim_loss.1} parent=1 // pred_check
      _
    $region27: #{ssim_loss.1} parent=1 // pred_check_branch
      %1075 = sbr.rel (0) target = $region29
    $region28: #{ssim_loss.1} parent=1 // pred_region
      _
    $region29: #{ssim_loss.1} parent=1 // pred_fallthru
      _
    %1076 = vsyncpa [#allocation3], 1

</llo_original>
